<compile_context>
chip_gen: v5e
topology: v5e:2x2
jax: 0.10.0
libtpu: 0.0.40
codegen_flags: <defaults>
</compile_context>

<pallas_src>
import functools

import jax
import jax.numpy as jnp
from jax.experimental import pallas as pl
from jax.experimental.pallas import tpu as pltpu

_LANE = 128


def _round_up(x, m):
    return (x + m - 1) // m * m


def _choose_batch_tile(batch, ni, seq, ih, hp, x_bytes, out_bytes,
                       target_rows_img=512, vmem_budget=24 << 20):
    """Pick the batch tile `tb` (tb | batch) such that:
      * double-buffered streaming blocks + the f32 scratch fit `vmem_budget`
        (conservative so the tile also fits v7x's 64 MiB physical VMEM),
      * the grid has >= 2 steps whenever batch >= 2 (lets the ("parallel",)
        grid axis span both v7x TensorCores),
      * within those, the largest tb with rows_img = tb*ni <= target_rows_img
        (big MXU M dim, amortizes the ~0.35us per-grid-step overhead).
    """
    def step_bytes(tb):
        streams = tb * (ni * ih * x_bytes + seq * 4 + seq * hp * out_bytes)
        return 2 * streams + tb * seq * hp * 4   # 2x (double-buffer) + f32 scratch

    divisors = [d for d in range(1, batch + 1) if batch % d == 0]
    fitting = [d for d in divisors if step_bytes(d) <= vmem_budget] or [1]
    multi = [d for d in fitting if batch // d >= 2]
    cand = multi if multi else fitting
    good = [d for d in cand if d * ni <= target_rows_img]
    return max(good) if good else min(cand)


# ----------------------------------------------------------------------------- #
# Pallas kernel: one batch tile per grid step.
#   x_ref   : (tile_b, ni, img_hidden)      streamed
#   ids_ref : (tile_b, seq, 1) int32        streamed
#   out_ref : (tile_b, seq, Hp)             streamed
#   others  : grid-invariant residents
# ----------------------------------------------------------------------------- #
def _img_bert_embed_kernel(x_ref, ids_ref, w_ref, add_ref, tdelta_ref,
                           gamma_ref, beta_ref, out_ref, y_ref, *,
                           n_types, eps, inv_h):
    tb, ni, ih = x_ref.shape
    seq, hp = add_ref.shape

    # (1) Image-token projection on the MXU (f32 accumulation).  Features are
    #     consumed in the dtype the producer emitted (bf16 recommended) and
    #     cast to the MXU weight dtype on the fly.
    x2 = x_ref[...].reshape(tb * ni, ih)
    mm = jnp.dot(x2.astype(w_ref.dtype), w_ref[...],
                 preferred_element_type=jnp.float32)            # (tb*ni, Hp) f32

    # (2) Pure data-movement scatter (replaces the old placement matmul):
    #     initialize the (tb, seq, Hp) scratch with the batch-invariant slab
    #     (CLS/SEP word emb + image linear bias + positions + type-0 emb) and
    #     write the projected image rows into sequence slots 1..ni.
    y_ref[...] = jnp.broadcast_to(add_ref[...][None], (tb, seq, hp))
    y_ref[:, 1:1 + ni, :] = mm.reshape(tb, ni, hp) + add_ref[1:1 + ni, :][None]
    y = y_ref[...]

    # (3) Token-type embeddings as deltas vs. type 0 (n_types - 1 selects).
    ids = ids_ref[...]                                          # (tb, seq, 1) int32
    for v in range(1, n_types):
        sel = (ids == v).astype(jnp.float32)                    # (tb, seq, 1)
        y = y + sel * tdelta_ref[v - 1:v, :]                    # lane-broadcast delta row

    # (4) LayerNorm over the hidden axis — single pass, clamped variance.
    #     Padded hidden lanes are exactly zero, so stats use the real 1/H.
    s1 = jnp.sum(y, axis=-1, keepdims=True)
    s2 = jnp.sum(y * y, axis=-1, keepdims=True)
    mean = s1 * inv_h
    var = jnp.maximum(s2 * inv_h - mean * mean, 0.0)
    norm = (y - mean) * jax.lax.rsqrt(var + eps)
    out_ref[...] = (norm * gamma_ref[...] + beta_ref[...]).astype(out_ref.dtype)


def image_bert_embeddings_pallas(x_img, ids, w_mxu, add_const, type_delta,
                                 gamma, beta, *, tile_b, n_types, eps, hidden,
                                 out_dtype):
    batch, ni, ih = x_img.shape
    seq, h_pad = add_const.shape
    ntd = type_delta.shape[0]
    grid_b = batch // tile_b

    # VMEM footprint estimate: double-buffered streams + double-buffered
    # residents + the f32 scratch, plus slack — derived, not a blanket 48 MiB.
    x_bytes = jnp.dtype(x_img.dtype).itemsize
    w_bytes = jnp.dtype(w_mxu.dtype).itemsize
    out_bytes = jnp.dtype(out_dtype).itemsize
    streams = tile_b * (ni * ih * x_bytes + seq * 4 + seq * h_pad * out_bytes)
    resident = ih * h_pad * w_bytes + (seq + ntd + 2) * h_pad * 4
    est = 2 * (streams + resident) + tile_b * seq * h_pad * 4 + (2 << 20)
    vmem_limit = int(min(max(est, 8 << 20), 32 << 20))

    kernel = functools.partial(_img_bert_embed_kernel,
                               n_types=n_types, eps=eps, inv_h=1.0 / hidden)
    # TODO(synk): pin the grid-invariant residents with pipeline_mode=pl.Buffered(1)
    #             (extra v7x VMEM headroom) once single-buffering is confirmed on
    #             the target jax version.
    return pl.pallas_call(
        kernel,
        out_shape=jax.ShapeDtypeStruct((batch, seq, h_pad), out_dtype),
        grid_spec=pltpu.PrefetchScalarGridSpec(
            num_scalar_prefetch=0,
            grid=(grid_b,),
            in_specs=[
                pl.BlockSpec((tile_b, ni, ih), lambda i: (i, 0, 0)),   # image feats (stream)
                pl.BlockSpec((tile_b, seq, 1), lambda i: (i, 0, 0)),   # token-type ids (stream)
                pl.BlockSpec((ih, h_pad), lambda i: (0, 0)),           # W^T (resident)
                pl.BlockSpec((seq, h_pad), lambda i: (0, 0)),          # additive slab (resident)
                pl.BlockSpec((ntd, h_pad), lambda i: (0, 0)),          # type deltas (resident)
                pl.BlockSpec((1, h_pad), lambda i: (0, 0)),            # LN gamma
                pl.BlockSpec((1, h_pad), lambda i: (0, 0)),            # LN beta
            ],
            out_specs=pl.BlockSpec((tile_b, seq, h_pad), lambda i: (i, 0, 0)),
            scratch_shapes=[pltpu.VMEM((tile_b, seq, h_pad), jnp.float32)],
        ),
        compiler_params=pltpu.CompilerParams(
            dimension_semantics=("parallel",),
            vmem_limit_bytes=vmem_limit),
    )(x_img, ids, w_mxu, add_const, type_delta, gamma, beta)


# ----------------------------------------------------------------------------- #
# Module wrapper (parameter setup + cheap glue in plain JAX)
# ----------------------------------------------------------------------------- #
class ImageBertEmbeddingsPallas:
    def __init__(self, key, *, vocab_size, type_vocab_size, max_position,
                 img_hidden_sz, hidden_sz, num_image_embeds, cls_id, sep_id,
                 pos=True, eps=1e-12, mxu_dtype=jnp.bfloat16,
                 out_dtype=jnp.float32):
        ks = jax.random.split(key, 5)
        s = 0.02
        # Canonical f32 parameters (PyTorch layout: lin_w is (H, img_hidden)).
        self.word_emb = s * jax.random.normal(ks[0], (vocab_size, hidden_sz), jnp.float32)
        self.pos_emb = s * jax.random.normal(ks[1], (max_position, hidden_sz), jnp.float32)
        self.type_emb = s * jax.random.normal(ks[2], (type_vocab_size, hidden_sz), jnp.float32)
        self.lin_w = s * jax.random.normal(ks[3], (hidden_sz, img_hidden_sz), jnp.float32)
        self.lin_b = s * jax.random.normal(ks[4], (hidden_sz,), jnp.float32)
        self.ln_gamma = jnp.ones((hidden_sz,), jnp.float32)
        self.ln_beta = jnp.zeros((hidden_sz,), jnp.float32)

        self.num_image_embeds = num_image_embeds
        self.hidden_sz = hidden_sz
        self.img_hidden_sz = img_hidden_sz
        self.cls_id = cls_id
        self.sep_id = sep_id
        self.pos = pos
        self.eps = eps
        self.mxu_dtype = mxu_dtype
        self.out_dtype = out_dtype
        self.n_types = type_vocab_size
        self.seq_len = num_image_embeds + 2
        self.h_pad = _round_up(hidden_sz, _LANE)   # lane-dense output (last dim % 128)

        # ---- one-time kernel-side parameter prep ------------------------------
        S, H, Hp = self.seq_len, hidden_sz, self.h_pad
        # Linear weight pre-transposed once to (img_hidden, Hp), stored in MXU dtype.
        w_t = jnp.zeros((img_hidden_sz, Hp), jnp.float32).at[:, :H].set(self.lin_w.T)
        self.w_mxu = w_t.astype(mxu_dtype)
        # Batch-invariant additive slab (S, Hp): CLS/SEP word embeddings, linear
        # bias on image rows, (optional) positions, plus the type-0 embedding.
        addc = jnp.zeros((S, Hp), jnp.float32)
        addc = addc.at[0, :H].set(self.word_emb[cls_id])
        addc = addc.at[S - 1, :H].set(self.word_emb[sep_id])
        addc = addc.at[1:S - 1, :H].add(self.lin_b)
        if pos:
            addc = addc.at[:, :H].add(self.pos_emb[:S])
        addc = addc.at[:, :H].add(self.type_emb[0])
        self.add_const = addc
        # Token-type deltas relative to type 0 (only n_types-1 in-kernel selects).
        ntd = max(1, type_vocab_size - 1)
        td = jnp.zeros((ntd, Hp), jnp.float32)
        if type_vocab_size > 1:
            td = td.at[:type_vocab_size - 1, :H].set(self.type_emb[1:] - self.type_emb[0])
        self.type_delta = td
        # LN params padded to Hp (pads zero -> padded output lanes are zero).
        self.gamma_pad = jnp.zeros((1, Hp), jnp.float32).at[:, :H].set(self.ln_gamma)
        self.beta_pad = jnp.zeros((1, Hp), jnp.float32).at[:, :H].set(self.ln_beta)

    def __call__(self, input_imgs, token_type_ids):
        B, ni, ih = input_imgs.shape
        S, H, Hp = self.seq_len, self.hidden_sz, self.h_pad
        assert ni == self.num_image_embeds and ih == self.img_hidden_sz
        assert token_type_ids.shape == (B, S)

        tile_b = _choose_batch_tile(
            B, ni, S, ih, Hp,
            x_bytes=jnp.dtype(input_imgs.dtype).itemsize,
            out_bytes=jnp.dtype(self.out_dtype).itemsize)
        ids = token_type_ids.reshape(B, S, 1).astype(jnp.int32)   # cheap reshape

        out = image_bert_embeddings_pallas(
            input_imgs, ids, self.w_mxu, self.add_const, self.type_delta,
            self.gamma_pad, self.beta_pad,
            tile_b=tile_b, n_types=self.n_types, eps=self.eps, hidden=H,
            out_dtype=self.out_dtype)

        if Hp != H:
            out = out[..., :H]   # only when hidden_sz isn't lane aligned (tiny test sizes)
        # Dropout: inference mode -> identity.
        # TODO(synk): training-mode dropout (random mask via pltpu.prng_*) not implemented.
        return out


# ----------------------------------------------------------------------------- #
# Pure-JAX reference for verification
# ----------------------------------------------------------------------------- #
def reference_forward(mod, input_imgs, token_type_ids):
    B = input_imgs.shape[0]
    S = mod.num_image_embeds + 2
    cls = jnp.broadcast_to(mod.word_emb[mod.cls_id][None, None], (B, 1, mod.hidden_sz))
    sep = jnp.broadcast_to(mod.word_emb[mod.sep_id][None, None], (B, 1, mod.hidden_sz))
    imgs = jnp.einsum("bsi,hi->bsh", input_imgs, mod.lin_w) + mod.lin_b
    tok = jnp.concatenate([cls, imgs, sep], axis=1)
    pos = mod.pos_emb[:S][None]
    tt = jnp.take(mod.type_emb, token_type_ids, axis=0)
    emb = tok + tt + (pos if mod.pos else 0.0)
    mean = emb.mean(-1, keepdims=True)
    var = ((emb - mean) ** 2).mean(-1, keepdims=True)
    normed = (emb - mean) / jnp.sqrt(var + mod.eps)
    return normed * mod.ln_gamma + mod.ln_beta


if __name__ == "__main__":
    key = jax.random.PRNGKey(0)
    k_param, k_img, k_tt = jax.random.split(key, 3)

    # Small shapes consistent with the module's forward.
    batch = 2
    num_image_embeds = 6          # -> seq_len = 8
    img_hidden_sz = 64
    hidden_sz = 32
    vocab_size = 30
    type_vocab_size = 2
    max_position = 16
    cls_id, sep_id = 1, 2

    common = dict(vocab_size=vocab_size, type_vocab_size=type_vocab_size,
                  max_position=max_position, img_hidden_sz=img_hidden_sz,
                  hidden_sz=hidden_sz, num_image_embeds=num_image_embeds,
                  cls_id=cls_id, sep_id=sep_id, pos=True)

    # f32 check path (f32 weights, f32 output) and a fast bf16 streaming path
    # (bf16 weights, bf16 output, bf16 inputs as if the producer emitted bf16).
    mod_f32 = ImageBertEmbeddingsPallas(
        k_param, mxu_dtype=jnp.float32, out_dtype=jnp.float32, **common)
    mod_bf16 = ImageBertEmbeddingsPallas(
        k_param, mxu_dtype=jnp.bfloat16, out_dtype=jnp.bfloat16, **common)

    input_imgs = jax.random.normal(
        k_img, (batch, num_image_embeds, img_hidden_sz), jnp.float32)
    token_type_ids = jax.random.randint(
        k_tt, (batch, num_image_embeds + 2), 0, type_vocab_size)

    # f32 path: must match the pure-JAX reference tightly (structure check).
    out_f32 = jax.block_until_ready(mod_f32(input_imgs, token_type_ids))
    ref = reference_forward(mod_f32, input_imgs, token_type_ids)
    assert out_f32.shape == (batch, num_image_embeds + 2, hidden_sz)
    assert jnp.allclose(out_f32, ref, atol=2e-5, rtol=2e-5), "f32 kernel mismatch vs reference"

    # bf16 streaming path (bf16 inputs/weights/output; f32 accumulation + f32 LN).
    imgs_bf16 = input_imgs.astype(jnp.bfloat16)
    out_bf16 = jax.block_until_ready(mod_bf16(imgs_bf16, token_type_ids))
    ref_b = reference_forward(mod_bf16, imgs_bf16.astype(jnp.float32), token_type_ids)
    assert out_bf16.dtype == jnp.bfloat16
    assert jnp.allclose(out_bf16.astype(jnp.float32), ref_b, atol=5e-2, rtol=0.0), \
        "bf16 kernel mismatch vs reference"

    print("KERNEL_OK")
</pallas_src>

<mosaic_0001>
module attributes {stable_mosaic.version = 11 : i64} {
  func.func @_img_bert_embed_kernel(%arg0: i32, %arg1: memref<1x6x64xf32, #tpu.memory_space<vmem>>, %arg2: memref<1x8x1xi32, #tpu.memory_space<vmem>>, %arg3: memref<64x128xf32, #tpu.memory_space<vmem>>, %arg4: memref<8x128xf32, #tpu.memory_space<vmem>>, %arg5: memref<1x128xf32, #tpu.memory_space<vmem>>, %arg6: memref<1x128xf32, #tpu.memory_space<vmem>>, %arg7: memref<1x128xf32, #tpu.memory_space<vmem>>, %arg8: memref<1x8x128xf32, #tpu.memory_space<vmem>>, %arg9: memref<1x8x128xf32, #tpu.memory_space<vmem>>) attributes {dimension_semantics = [#tpu.dimension_semantics<parallel>], iteration_bounds = array<i64: 2>, scalar_prefetch = 0 : i64, scratch_operands = 1 : i64, tpu.core_type = #tpu.core_type<tc>, window_params = [{transform_indices = @transform_0, window_bounds = array<i64: 1, 6, 64>}, {transform_indices = @transform_1, window_bounds = array<i64: 1, 8, 1>}, {pipeline_mode = #tpu.pipeline_mode<synchronous>, transform_indices = @transform_2, window_bounds = array<i64: 64, 128>}, {pipeline_mode = #tpu.pipeline_mode<synchronous>, transform_indices = @transform_3, window_bounds = array<i64: 8, 128>}, {pipeline_mode = #tpu.pipeline_mode<synchronous>, transform_indices = @transform_4, window_bounds = array<i64: 1, 128>}, {pipeline_mode = #tpu.pipeline_mode<synchronous>, transform_indices = @transform_5, window_bounds = array<i64: 1, 128>}, {pipeline_mode = #tpu.pipeline_mode<synchronous>, transform_indices = @transform_6, window_bounds = array<i64: 1, 128>}, {transform_indices = @transform_7, window_bounds = array<i64: 1, 8, 128>}]} {
    %c0 = arith.constant 0 : index
    %c0_0 = arith.constant 0 : index
    %c0_1 = arith.constant 0 : index
    %0 = vector.load %arg1[%c0, %c0_0, %c0_1] : memref<1x6x64xf32, #tpu.memory_space<vmem>>, vector<1x6x64xf32>
    %1 = vector.shape_cast %0 : vector<1x6x64xf32> to vector<6x64xf32>
    %c0_2 = arith.constant 0 : index
    %c0_3 = arith.constant 0 : index
    %2 = vector.load %arg3[%c0_2, %c0_3] : memref<64x128xf32, #tpu.memory_space<vmem>>, vector<64x128xf32>
    %cst = arith.constant dense<0.000000e+00> : vector<6x128xf32>
    %3 = tpu.matmul %1, %2, %cst {dimension_numbers = #tpu.dot_dimension_numbers<[1], [0], [0], [1], [0, 0, 1, 1], [], []>} : vector<6x64xf32>, vector<64x128xf32>, vector<6x128xf32> -> vector<6x128xf32>
    %c0_4 = arith.constant 0 : index
    %c0_5 = arith.constant 0 : index
    %4 = vector.load %arg4[%c0_4, %c0_5] : memref<8x128xf32, #tpu.memory_space<vmem>>, vector<8x128xf32>
    %5 = vector.shape_cast %4 : vector<8x128xf32> to vector<1x8x128xf32>
    %c0_6 = arith.constant 0 : index
    %c0_7 = arith.constant 0 : index
    %c0_8 = arith.constant 0 : index
    %6 = vector.load %arg9[%c0_6, %c0_7, %c0_8] : memref<1x8x128xf32, #tpu.memory_space<vmem>>, vector<1x8x128xf32>
    tpu.vector_store %arg9[%c0_6, %c0_7, %c0_8], %5 {strides = array<i32>} : memref<1x8x128xf32, #tpu.memory_space<vmem>>, vector<1x8x128xf32>,
    %7 = vector.shape_cast %3 : vector<6x128xf32> to vector<1x6x128xf32>
    %c1 = arith.constant 1 : index
    %c0_9 = arith.constant 0 : index
    %8 = vector.load %arg4[%c1, %c0_9] : memref<8x128xf32, #tpu.memory_space<vmem>>, vector<6x128xf32>
    %9 = vector.shape_cast %8 : vector<6x128xf32> to vector<1x6x128xf32>
    %10 = arith.addf %7, %9 : vector<1x6x128xf32>
    %c0_10 = arith.constant 0 : index
    %c1_11 = arith.constant 1 : index
    %c0_12 = arith.constant 0 : index
    %11 = vector.load %arg9[%c0_10, %c1_11, %c0_12] : memref<1x8x128xf32, #tpu.memory_space<vmem>>, vector<1x6x128xf32>
    tpu.vector_store %arg9[%c0_10, %c1_11, %c0_12], %10 {strides = array<i32>} : memref<1x8x128xf32, #tpu.memory_space<vmem>>, vector<1x6x128xf32>,
    %c0_13 = arith.constant 0 : index
    %c0_14 = arith.constant 0 : index
    %c0_15 = arith.constant 0 : index
    %12 = vector.load %arg9[%c0_13, %c0_14, %c0_15] : memref<1x8x128xf32, #tpu.memory_space<vmem>>, vector<1x8x128xf32>
    %c0_16 = arith.constant 0 : index
    %c0_17 = arith.constant 0 : index
    %c0_18 = arith.constant 0 : index
    %13 = vector.load %arg2[%c0_16, %c0_17, %c0_18] : memref<1x8x1xi32, #tpu.memory_space<vmem>>, vector<1x8x1xi32>
    %c1_i32 = arith.constant 1 : i32
    %14 = vector.broadcast %c1_i32 : i32 to vector<1x8x1xi32>
    %15 = arith.cmpi eq, %13, %14 : vector<1x8x1xi32>
    %16 = arith.extui %15 : vector<1x8x1xi1> to vector<1x8x1xi32>
    %17 = arith.sitofp %16 : vector<1x8x1xi32> to vector<1x8x1xf32>
    %c0_19 = arith.constant 0 : index
    %c0_20 = arith.constant 0 : index
    %18 = vector.load %arg5[%c0_19, %c0_20] : memref<1x128xf32, #tpu.memory_space<vmem>>, vector<1x128xf32>
    %19 = vector.shape_cast %18 : vector<1x128xf32> to vector<1x1x128xf32>
    %20 = vector.broadcast %17 : vector<1x8x1xf32> to vector<1x8x128xf32>
    %21 = vector.broadcast %19 : vector<1x1x128xf32> to vector<1x8x128xf32>
    %22 = arith.mulf %20, %21 : vector<1x8x128xf32>
    %23 = arith.addf %12, %22 : vector<1x8x128xf32>
    %cst_21 = arith.constant dense<0.000000e+00> : vector<1x8xf32>
    %24 = vector.multi_reduction <add>, %23, %cst_21 [2] : vector<1x8x128xf32> to vector<1x8xf32>
    %25 = vector.shape_cast %24 : vector<1x8xf32> to vector<1x8x1xf32>
    %26 = arith.mulf %23, %23 : vector<1x8x128xf32>
    %cst_22 = arith.constant dense<0.000000e+00> : vector<1x8xf32>
    %27 = vector.multi_reduction <add>, %26, %cst_22 [2] : vector<1x8x128xf32> to vector<1x8xf32>
    %28 = vector.shape_cast %27 : vector<1x8xf32> to vector<1x8x1xf32>
    %cst_23 = arith.constant 3.125000e-02 : f32
    %29 = vector.broadcast %cst_23 : f32 to vector<1x8x1xf32>
    %30 = arith.mulf %25, %29 : vector<1x8x1xf32>
    %cst_24 = arith.constant 3.125000e-02 : f32
    %31 = vector.broadcast %cst_24 : f32 to vector<1x8x1xf32>
    %32 = arith.mulf %28, %31 : vector<1x8x1xf32>
    %33 = arith.mulf %30, %30 : vector<1x8x1xf32>
    %34 = arith.subf %32, %33 : vector<1x8x1xf32>
    %cst_25 = arith.constant 0.000000e+00 : f32
    %35 = vector.broadcast %cst_25 : f32 to vector<1x8x1xf32>
    %36 = arith.maximumf %34, %35 : vector<1x8x1xf32>
    %37 = vector.broadcast %30 : vector<1x8x1xf32> to vector<1x8x128xf32>
    %38 = arith.subf %23, %37 : vector<1x8x128xf32>
    %cst_26 = arith.constant 9.99999996E-13 : f32
    %39 = vector.broadcast %cst_26 : f32 to vector<1x8x1xf32>
    %40 = arith.addf %36, %39 : vector<1x8x1xf32>
    %41 = math.rsqrt %40 : vector<1x8x1xf32>
    %42 = vector.broadcast %41 : vector<1x8x1xf32> to vector<1x8x128xf32>
    %43 = arith.mulf %38, %42 : vector<1x8x128xf32>
    %c0_27 = arith.constant 0 : index
    %c0_28 = arith.constant 0 : index
    %44 = vector.load %arg6[%c0_27, %c0_28] : memref<1x128xf32, #tpu.memory_space<vmem>>, vector<1x128xf32>
    %45 = vector.shape_cast %44 : vector<1x128xf32> to vector<1x1x128xf32>
    %46 = vector.broadcast %45 : vector<1x1x128xf32> to vector<1x8x128xf32>
    %47 = arith.mulf %43, %46 : vector<1x8x128xf32>
    %c0_29 = arith.constant 0 : index
    %c0_30 = arith.constant 0 : index
    %48 = vector.load %arg7[%c0_29, %c0_30] : memref<1x128xf32, #tpu.memory_space<vmem>>, vector<1x128xf32>
    %49 = vector.shape_cast %48 : vector<1x128xf32> to vector<1x1x128xf32>
    %50 = vector.broadcast %49 : vector<1x1x128xf32> to vector<1x8x128xf32>
    %51 = arith.addf %47, %50 : vector<1x8x128xf32>
    %c0_31 = arith.constant 0 : index
    %c0_32 = arith.constant 0 : index
    %c0_33 = arith.constant 0 : index
    %52 = vector.load %arg8[%c0_31, %c0_32, %c0_33] : memref<1x8x128xf32, #tpu.memory_space<vmem>>, vector<1x8x128xf32>
    tpu.vector_store %arg8[%c0_31, %c0_32, %c0_33], %51 {strides = array<i32>} : memref<1x8x128xf32, #tpu.memory_space<vmem>>, vector<1x8x128xf32>,
    return
  }
  func.func @transform_0(%arg0: i32) -> (i32, i32, i32) {
    %c0_i32 = arith.constant 0 : i32
    %c0_i32_0 = arith.constant 0 : i32
    %c0_i32_1 = arith.constant 0 : i32
    return %arg0, %c0_i32, %c0_i32_0 : i32, i32, i32
  }
  func.func @transform_1(%arg0: i32) -> (i32, i32, i32) {
    %c0_i32 = arith.constant 0 : i32
    %c0_i32_0 = arith.constant 0 : i32
    %c0_i32_1 = arith.constant 0 : i32
    return %arg0, %c0_i32, %c0_i32_0 : i32, i32, i32
  }
  func.func @transform_2(%arg0: i32) -> (i32, i32) {
    %c0_i32 = arith.constant 0 : i32
    %c0_i32_0 = arith.constant 0 : i32
    %c0_i32_1 = arith.constant 0 : i32
    return %c0_i32, %c0_i32_0 : i32, i32
  }
  func.func @transform_3(%arg0: i32) -> (i32, i32) {
    %c0_i32 = arith.constant 0 : i32
    %c0_i32_0 = arith.constant 0 : i32
    %c0_i32_1 = arith.constant 0 : i32
    return %c0_i32, %c0_i32_0 : i32, i32
  }
  func.func @transform_4(%arg0: i32) -> (i32, i32) {
    %c0_i32 = arith.constant 0 : i32
    %c0_i32_0 = arith.constant 0 : i32
    %c0_i32_1 = arith.constant 0 : i32
    return %c0_i32, %c0_i32_0 : i32, i32
  }
  func.func @transform_5(%arg0: i32) -> (i32, i32) {
    %c0_i32 = arith.constant 0 : i32
    %c0_i32_0 = arith.constant 0 : i32
    %c0_i32_1 = arith.constant 0 : i32
    return %c0_i32, %c0_i32_0 : i32, i32
  }
  func.func @transform_6(%arg0: i32) -> (i32, i32) {
    %c0_i32 = arith.constant 0 : i32
    %c0_i32_0 = arith.constant 0 : i32
    %c0_i32_1 = arith.constant 0 : i32
    return %c0_i32, %c0_i32_0 : i32, i32
  }
  func.func @transform_7(%arg0: i32) -> (i32, i32, i32) {
    %c0_i32 = arith.constant 0 : i32
    %c0_i32_0 = arith.constant 0 : i32
    %c0_i32_1 = arith.constant 0 : i32
    return %arg0, %c0_i32, %c0_i32_0 : i32, i32, i32
  }
}

</mosaic_0001>

<llo_original>
// kernel: tpu_custom_call.1
$region0: #{tpu_custom_call.1}
  #allocation0 [shape = 'u32[]', space=smem, size = 0x4, offset = 0x4, fixed_abs, tag = 'smem constant byte address 0x4 - core index']
  #allocation1 [shape = 'u32[72,128]{1,0:T(1,128)}', space=vmem, size = 0x9000, scoped, tag = 'internal scratch']
  #allocation2 [shape = 'f32[1,8,128]{2,1,0:T(8,128)}', space=vmem, size = 0x1000, scoped, tag = 'scratch operand']
  %s0 = inlined_call_operand.vmem [shape: f32[2,6,64], index: 0, kind: input, shape index: {}]
  %s1 = inlined_call_operand.vmem [shape: s32[2,8,1], index: 1, kind: input, shape index: {}]
  %s2 = inlined_call_operand.hbm [shape: f32[64,128], index: 2, kind: input, shape index: {}]
  %s3 = inlined_call_operand.vmem [shape: f32[8,128], index: 3, kind: input, shape index: {}]
  %s4 = inlined_call_operand.vmem [shape: f32[1,128], index: 4, kind: input, shape index: {}]
  %s5 = inlined_call_operand.vmem [shape: f32[1,128], index: 5, kind: input, shape index: {}]
  %s6 = inlined_call_operand.vmem [shape: f32[1,128], index: 6, kind: input, shape index: {}]
  %s7 = inlined_call_operand.hbm [shape: f32[2,8,128], index: 7, kind: output, shape index: {}]
  %s8 = sld [smem:[#allocation0]]
  $region65: #{tpu_custom_call.1} parent=0
    _
  %s10 = ssub.s32 1, %s8
  %s11 = scalar_select 0, %s10, %s8
  $region1: #{tpu_custom_call.1} parent=0
    #allocation3 [shape = 'u8[32768]{0}', space=vmem, size = 0x8000, scoped, tag = 'input window, operand 2, single buffered']
    #allocation4 [shape = 's32[2]{0}', space=sflag, size = 0x8, scoped, tag = 'scoped memory for tpu_custom_call.1']
    #allocation5 [shape = 's32[2]{0}', space=sflag, size = 0x8, scoped, tag = 'scoped memory for tpu_custom_call.1']
    #allocation6 [shape = 'u8[8192]{0}', space=vmem, size = 0x2000, scoped, tag = 'output window, operand 0']
    %12 = vsyncpa [#allocation4], 0
    %13 = vsyncpa [#allocation5], 0
    %s14 = scalar_lea.sflag [#allocation5], 1
    %15 = vsyncpa %s14, 0
    loop: start=0, step=1, limit=4
    $region2: #{tpu_custom_call.1} parent=1 // loop_pre_header
      _
    $region3: #{tpu_custom_call.1} parent=1 // loop_header
      %s17 = sphi 0, %s21
      %p18 = scmp.ge.s32.totalorder %s17, 4
      %s27 = sphi 0, %s29
      %s30 = sphi 0, %s27
      %s31 = sphi 0, %s30
      %s47 = sphi 0, %s31
      %s53 = sphi 0, %s55
      %s56 = sphi 0, %s53
      %s57 = sphi 0, %s56
      %s73 = sphi 0, %s57
      %s77 = sphi 0, %s77
      %s79 = sphi 0, %s77
      %s80 = sphi 0, %s79
      %s94 = sphi 0, %s80
      %s98 = sphi 0, %s98
      %s100 = sphi 0, %s98
      %s101 = sphi 0, %s100
      %s115 = sphi 0, %s101
      %s119 = sphi 0, %s119
      %s121 = sphi 0, %s119
      %s122 = sphi 0, %s121
      %s136 = sphi 0, %s122
      %s140 = sphi 0, %s140
      %s142 = sphi 0, %s140
      %s143 = sphi 0, %s142
      %s157 = sphi 0, %s143
      %s161 = sphi 0, %s161
      %s163 = sphi 0, %s161
      %s164 = sphi 0, %s163
      %s178 = sphi 0, %s164
      %s184 = sphi 0, %s186
      %s187 = sphi 0, %s184
      %s188 = sphi 0, %s187
      %s204 = sphi 0, %s188
    $region4: #{tpu_custom_call.1} parent=1 // loop_header_branch
      %20 = sbr.rel (%p18) target = $region8
    $region5: #{tpu_custom_call.1} parent=1 // loop_body
      %s22 = ssub.s32 %s17, 1
      %s23 = ssub.s32 %s17, 2
      %s24 = sadd.s32 %s17, 1
      %s25 = ssub.s32 %s17, %s24
      %p26 = scmp.eq.s32.totalorder %s25, 0
      %s28 = sadd.s32 %s27, 1
      %s29 = scalar_select %p26, %s27, %s28
      %p32 = pneg %p26
      %p33 = scmp.eq.s32.totalorder %s17, 1
      %p34 = por %p32, %p33
      %p35 = scmp.ne.s32.totalorder %s27, %s30
      %p36 = scmp.eq.s32.totalorder %s17, 0
      %p37 = por %p35, %p36
      %p38 = scmp.ne.s32.totalorder %s27, %s30
      %p39 = scmp.eq.s32.totalorder %s22, 1
      %p40 = por %p38, %p39
      %p41 = scmp.ne.s32.totalorder %s30, %s31
      %p42 = scmp.eq.s32.totalorder %s22, 0
      %p43 = por %p41, %p42
      %p44 = scmp.ne.s32.totalorder %s30, %s31
      %p45 = scmp.eq.s32.totalorder %s23, 1
      %p46 = por %p44, %p45
      %p48 = scmp.ne.s32.totalorder %s31, %s47
      %p49 = scmp.eq.s32.totalorder %s23, 0
      %p50 = por %p48, %p49
      %s51 = ssub.s32 %s17, %s24
      %p52 = scmp.eq.s32.totalorder %s51, 0
      %s54 = sadd.s32 %s53, 1
      %s55 = scalar_select %p52, %s53, %s54
      %p58 = pneg %p52
      %p59 = scmp.eq.s32.totalorder %s17, 1
      %p60 = por %p58, %p59
      %p61 = scmp.ne.s32.totalorder %s53, %s56
      %p62 = scmp.eq.s32.totalorder %s17, 0
      %p63 = por %p61, %p62
      %p64 = scmp.ne.s32.totalorder %s53, %s56
      %p65 = scmp.eq.s32.totalorder %s22, 1
      %p66 = por %p64, %p65
      %p67 = scmp.ne.s32.totalorder %s56, %s57
      %p68 = scmp.eq.s32.totalorder %s22, 0
      %p69 = por %p67, %p68
      %p70 = scmp.ne.s32.totalorder %s56, %s57
      %p71 = scmp.eq.s32.totalorder %s23, 1
      %p72 = por %p70, %p71
      %p74 = scmp.ne.s32.totalorder %s57, %s73
      %p75 = scmp.eq.s32.totalorder %s23, 0
      %p76 = por %p74, %p75
      %s78 = sadd.s32 %s77, 1
      %p81 = scmp.eq.s32.totalorder %s17, 1
      %p82 = scmp.ne.s32.totalorder %s77, %s79
      %p83 = scmp.eq.s32.totalorder %s17, 0
      %p84 = por %p82, %p83
      %p85 = scmp.ne.s32.totalorder %s77, %s79
      %p86 = scmp.eq.s32.totalorder %s22, 1
      %p87 = por %p85, %p86
      %p88 = scmp.ne.s32.totalorder %s79, %s80
      %p89 = scmp.eq.s32.totalorder %s22, 0
      %p90 = por %p88, %p89
      %p91 = scmp.ne.s32.totalorder %s79, %s80
      %p92 = scmp.eq.s32.totalorder %s23, 1
      %p93 = por %p91, %p92
      %p95 = scmp.ne.s32.totalorder %s80, %s94
      %p96 = scmp.eq.s32.totalorder %s23, 0
      %p97 = por %p95, %p96
      %s99 = sadd.s32 %s98, 1
      %p102 = scmp.eq.s32.totalorder %s17, 1
      %p103 = scmp.ne.s32.totalorder %s98, %s100
      %p104 = scmp.eq.s32.totalorder %s17, 0
      %p105 = por %p103, %p104
      %p106 = scmp.ne.s32.totalorder %s98, %s100
      %p107 = scmp.eq.s32.totalorder %s22, 1
      %p108 = por %p106, %p107
      %p109 = scmp.ne.s32.totalorder %s100, %s101
      %p110 = scmp.eq.s32.totalorder %s22, 0
      %p111 = por %p109, %p110
      %p112 = scmp.ne.s32.totalorder %s100, %s101
      %p113 = scmp.eq.s32.totalorder %s23, 1
      %p114 = por %p112, %p113
      %p116 = scmp.ne.s32.totalorder %s101, %s115
      %p117 = scmp.eq.s32.totalorder %s23, 0
      %p118 = por %p116, %p117
      %s120 = sadd.s32 %s119, 1
      %p123 = scmp.eq.s32.totalorder %s17, 1
      %p124 = scmp.ne.s32.totalorder %s119, %s121
      %p125 = scmp.eq.s32.totalorder %s17, 0
      %p126 = por %p124, %p125
      %p127 = scmp.ne.s32.totalorder %s119, %s121
      %p128 = scmp.eq.s32.totalorder %s22, 1
      %p129 = por %p127, %p128
      %p130 = scmp.ne.s32.totalorder %s121, %s122
      %p131 = scmp.eq.s32.totalorder %s22, 0
      %p132 = por %p130, %p131
      %p133 = scmp.ne.s32.totalorder %s121, %s122
      %p134 = scmp.eq.s32.totalorder %s23, 1
      %p135 = por %p133, %p134
      %p137 = scmp.ne.s32.totalorder %s122, %s136
      %p138 = scmp.eq.s32.totalorder %s23, 0
      %p139 = por %p137, %p138
      %s141 = sadd.s32 %s140, 1
      %p144 = scmp.eq.s32.totalorder %s17, 1
      %p145 = scmp.ne.s32.totalorder %s140, %s142
      %p146 = scmp.eq.s32.totalorder %s17, 0
      %p147 = por %p145, %p146
      %p148 = scmp.ne.s32.totalorder %s140, %s142
      %p149 = scmp.eq.s32.totalorder %s22, 1
      %p150 = por %p148, %p149
      %p151 = scmp.ne.s32.totalorder %s142, %s143
      %p152 = scmp.eq.s32.totalorder %s22, 0
      %p153 = por %p151, %p152
      %p154 = scmp.ne.s32.totalorder %s142, %s143
      %p155 = scmp.eq.s32.totalorder %s23, 1
      %p156 = por %p154, %p155
      %p158 = scmp.ne.s32.totalorder %s143, %s157
      %p159 = scmp.eq.s32.totalorder %s23, 0
      %p160 = por %p158, %p159
      %s162 = sadd.s32 %s161, 1
      %p165 = scmp.eq.s32.totalorder %s17, 1
      %p166 = scmp.ne.s32.totalorder %s161, %s163
      %p167 = scmp.eq.s32.totalorder %s17, 0
      %p168 = por %p166, %p167
      %p169 = scmp.ne.s32.totalorder %s161, %s163
      %p170 = scmp.eq.s32.totalorder %s22, 1
      %p171 = por %p169, %p170
      %p172 = scmp.ne.s32.totalorder %s163, %s164
      %p173 = scmp.eq.s32.totalorder %s22, 0
      %p174 = por %p172, %p173
      %p175 = scmp.ne.s32.totalorder %s163, %s164
      %p176 = scmp.eq.s32.totalorder %s23, 1
      %p177 = por %p175, %p176
      %p179 = scmp.ne.s32.totalorder %s164, %s178
      %p180 = scmp.eq.s32.totalorder %s23, 0
      %p181 = por %p179, %p180
      %s182 = ssub.s32 %s17, %s24
      %p183 = scmp.eq.s32.totalorder %s182, 0
      %s185 = sadd.s32 %s184, 1
      %s186 = scalar_select %p183, %s184, %s185
      %p189 = pneg %p183
      %p190 = scmp.eq.s32.totalorder %s17, 1
      %p191 = por %p189, %p190
      %p192 = scmp.ne.s32.totalorder %s184, %s187
      %p193 = scmp.eq.s32.totalorder %s17, 0
      %p194 = por %p192, %p193
      %p195 = scmp.ne.s32.totalorder %s184, %s187
      %p196 = scmp.eq.s32.totalorder %s22, 1
      %p197 = por %p195, %p196
      %p198 = scmp.ne.s32.totalorder %s187, %s188
      %p199 = scmp.eq.s32.totalorder %s22, 0
      %p200 = por %p198, %p199
      %p201 = scmp.ne.s32.totalorder %s187, %s188
      %p202 = scmp.eq.s32.totalorder %s23, 1
      %p203 = por %p201, %p202
      %p205 = scmp.ne.s32.totalorder %s188, %s204
      %p206 = scmp.eq.s32.totalorder %s23, 0
      %p207 = por %p205, %p206
      %p208 = scmp.le.s32.totalorder 1, %s17
      %p209 = scmp.lt.s32.totalorder %s17, 3
      %p210 = pnand %p208, %p209
      %p211 = pneg %p210
      // Predicated region
      $region9: #{tpu_custom_call.1} parent=5 // pred_check
        _
      $region10: #{tpu_custom_call.1} parent=5 // pred_check_branch
        %213 = sbr.rel (%p210) target = $region12
      $region11: #{tpu_custom_call.1} parent=5 // pred_region
        %s214 = ssub.s32 %s17, 1
        // Predicated region
        $region13: #{tpu_custom_call.1} parent=11 // pred_check
          %p215 = pneg %p90
        $region14: #{tpu_custom_call.1} parent=11 // pred_check_branch
          %217 = sbr.rel (%p215) target = $region16
        $region15: #{tpu_custom_call.1} parent=11 // pred_region
          %219 = vsyncadd [#allocation4], 0
          %s220 = sshll.u32 %s2, 4
          %s221 = int_to_ptr.hbm [resolvable:$true] %s220
          %s222 = sshll.u32 [#allocation3], 4
          %s223 = int_to_ptr.vmem [resolvable:$true] %s222
          %228 = dma.hbm_to_vmem [thread:$0]  %s221, 1024, %s223, [#allocation4], 128, 128, 8
        $region16: #{tpu_custom_call.1} parent=11 // pred_fallthru
          _
        // Predicated region
        $region17: #{tpu_custom_call.1} parent=11 // pred_check
          %p229 = pneg %p111
        $region18: #{tpu_custom_call.1} parent=11 // pred_check_branch
          %231 = sbr.rel (%p229) target = $region20
        $region19: #{tpu_custom_call.1} parent=11 // pred_region
          _
        $region20: #{tpu_custom_call.1} parent=11 // pred_fallthru
          _
        // Predicated region
        $region21: #{tpu_custom_call.1} parent=11 // pred_check
          %p232 = pneg %p132
        $region22: #{tpu_custom_call.1} parent=11 // pred_check_branch
          %234 = sbr.rel (%p232) target = $region24
        $region23: #{tpu_custom_call.1} parent=11 // pred_region
          _
        $region24: #{tpu_custom_call.1} parent=11 // pred_fallthru
          _
        // Predicated region
        $region25: #{tpu_custom_call.1} parent=11 // pred_check
          %p235 = pneg %p153
        $region26: #{tpu_custom_call.1} parent=11 // pred_check_branch
          %237 = sbr.rel (%p235) target = $region28
        $region27: #{tpu_custom_call.1} parent=11 // pred_region
          _
        $region28: #{tpu_custom_call.1} parent=11 // pred_fallthru
          _
        // Predicated region
        $region29: #{tpu_custom_call.1} parent=11 // pred_check
          %p238 = pneg %p174
        $region30: #{tpu_custom_call.1} parent=11 // pred_check_branch
          %240 = sbr.rel (%p238) target = $region32
        $region31: #{tpu_custom_call.1} parent=11 // pred_region
          _
        $region32: #{tpu_custom_call.1} parent=11 // pred_fallthru
          _
      $region12: #{tpu_custom_call.1} parent=5 // pred_fallthru
        _
      %p241 = scmp.lt.s32.totalorder %s17, 2
      // Predicated region
      $region33: #{tpu_custom_call.1} parent=5 // pred_check
        %p242 = pneg %p241
      $region34: #{tpu_custom_call.1} parent=5 // pred_check_branch
        %244 = sbr.rel (%p242) target = $region36
      $region35: #{tpu_custom_call.1} parent=5 // pred_region
        // Predicated region
        $region37: #{tpu_custom_call.1} parent=35 // pred_check
          %p245 = pneg %p37
        $region38: #{tpu_custom_call.1} parent=35 // pred_check_branch
          %247 = sbr.rel (%p245) target = $region40
        $region39: #{tpu_custom_call.1} parent=35 // pred_region
          %p248 = scmp.lt.s32.totalorder %s17, 1
          %s249 = scalar_select %p248, %s17, 1
          %s250 = smul.addr %s249, 8
          %s251 = scalar_lea.vmem %s0, %s250
        $region40: #{tpu_custom_call.1} parent=35 // pred_fallthru
          _
        // Predicated region
        $region41: #{tpu_custom_call.1} parent=35 // pred_check
          %p252 = pneg %p63
        $region42: #{tpu_custom_call.1} parent=35 // pred_check_branch
          %254 = sbr.rel (%p252) target = $region44
        $region43: #{tpu_custom_call.1} parent=35 // pred_region
          %p255 = scmp.lt.s32.totalorder %s17, 1
          %s256 = scalar_select %p255, %s17, 1
          %s257 = smul.addr %s256, 8
          %s258 = scalar_lea.vmem %s1, %s257
        $region44: #{tpu_custom_call.1} parent=35 // pred_fallthru
          _
      $region36: #{tpu_custom_call.1} parent=5 // pred_fallthru
        _
      %p259 = scmp.le.s32.totalorder 1, %s17
      %p260 = scmp.lt.s32.totalorder %s17, 3
      %p261 = pnand %p259, %p260
      %p262 = pneg %p261
      // Predicated region
      $region45: #{tpu_custom_call.1} parent=5 // pred_check
        _
      $region46: #{tpu_custom_call.1} parent=5 // pred_check_branch
        %264 = sbr.rel (%p261) target = $region48
      $region47: #{tpu_custom_call.1} parent=5 // pred_region
        %s265 = ssub.s32 %s17, 1
        // Predicated region
        $region49: #{tpu_custom_call.1} parent=47 // pred_check
          %p266 = pneg %p90
        $region50: #{tpu_custom_call.1} parent=47 // pred_check_branch
          %268 = sbr.rel (%p266) target = $region52
        $region51: #{tpu_custom_call.1} parent=47 // pred_region
          %270 = dma.done [#allocation4], 1024
        $region52: #{tpu_custom_call.1} parent=47 // pred_fallthru
          _
        %p271 = scmp.lt.s32.totalorder %s22, 1
        %s272 = scalar_select %p271, %s22, 1
        %s273 = smul.addr %s272, 8
        %s274 = scalar_lea.vmem %s0, %s273
        %p275 = pneg %p43
        %p276 = pneg %p40
        %p277 = scmp.lt.s32.totalorder %s22, 1
        %s278 = scalar_select %p277, %s22, 1
        %s279 = smul.addr %s278, 8
        %s280 = scalar_lea.vmem %s1, %s279
        %p281 = pneg %p69
        %p282 = pneg %p66
        %p283 = pneg %p90
        %p284 = pneg %p87
        %p285 = pneg %p111
        %p286 = pneg %p108
        %p287 = pneg %p132
        %p288 = pneg %p129
        %p289 = pneg %p153
        %p290 = pneg %p150
        %p291 = pneg %p174
        %p292 = pneg %p171
        %p293 = pneg %p200
        %p294 = pneg %p197
        %s295 = sand.u32 %s187, 1
        %s296 = scalar_lea.sflag [#allocation5], %s295
        %s297 = sand.u32 %s187, 1
        %s298 = smul.addr %s297, 8
        %s299 = scalar_lea.vmem [#allocation6], %s298
        %p300 = scmp.lt.s32.totalorder %s22, 1
        %s301 = scalar_select %p300, %s22, 1
        %s302 = smul.addr %s301, 8
        %s303 = scalar_lea.vmem %s0, %s302
        %p304 = scmp.lt.s32.totalorder %s22, 1
        %s305 = scalar_select %p304, %s22, 1
        %s306 = smul.addr %s305, 8
        %s307 = scalar_lea.vmem %s1, %s306
        %v308 = vld [vmem:[%s303] sm:$0x3f]
        %v309 = vld [vmem:[#allocation3] sm:$0xff]
        %v310 = vld [vmem:[#allocation3 + $0x8] sm:$0xff]
        %v311 = vld [vmem:[#allocation3 + $0x10] sm:$0xff]
        %v312 = vld [vmem:[#allocation3 + $0x18] sm:$0xff]
        %v313 = vld [vmem:[#allocation3 + $0x20] sm:$0xff]
        %v314 = vld [vmem:[#allocation3 + $0x28] sm:$0xff]
        %v315 = vld [vmem:[#allocation3 + $0x30] sm:$0xff]
        %v316 = vld [vmem:[#allocation3 + $0x38] sm:$0xff]
        %vm317 = vcmask 523264
        %v319 = vsel %vm317, %v308, 0
        %321 = vmatpush.msra.mxu0 0.0
        %322 = vmatpush.msra.mxu0 0.0
        %323 = vmatpush.msra.mxu0 0.0
        %324 = vmatpush.msra.mxu0 0.0
        %325 = vmatpush.msra.mxu0 0.0
        %326 = vmatpush.msra.mxu0 0.0
        %327 = vmatpush.msra.mxu0 0.0
        %328 = vmatpush.msra.mxu0 0.0
        %329 = vmatpush.msra.mxu0 %v316
        %330 = vmatpush.msra.mxu0 %v315
        %331 = vmatpush.msra.mxu0 %v314
        %332 = vmatpush.msra.mxu0 %v313
        %333 = vmatpush.msra.mxu0 %v312
        %334 = vmatpush.msra.mxu0 %v311
        %335 = vmatpush.msra.mxu0 %v310
        %336 = vmatpush.msra.mxu0 %v309
        %337 = vmatmul.f32.gmra.mxu0 %v319
        %v338 = vpop.f32.mrf.mxu0
        %v339 = vadd.f32 0.0, %v338
        %340 = vdwg.mxu0
        %v341 = vld [vmem:[%s3] sm:$0xff]
        %342 = vst [vmem:[#allocation2] sm:$0xff] %v341
        %v343 = vld [vmem:[%s3 + $0x1] sm:$0x3f]
        %v344 = vadd.f32 %v339, %v343
        %345 = vst [vmem:[#allocation2 + $0x1] sm:$0x3f] %v344
        %v346 = vld [vmem:[#allocation2] sm:$0xff]
        %v347 = vld [vmem:[%s307] sm:$0xff]
        %vm348 = vcmp.eq.s32.totalorder %v347, 1
        %v349 = vsel %vm348, 1, 0
        %v350 = vcvt.s32.f32 %v349
        %v351 = vld [vmem:[%s4] sm:$0x1]
        %353 = vset.pattern.permute.xlu0 0
        %354 = vperm.xlu0 %353, %v350
        %v355 = vpop.permute.xlu0 %354
        %v358 = vperm.slane %v351, 0
        %v360 = vmul.f32 %v355, %v358
        %v361 = vadd.f32 %v346, %v360
        %362 = vadd.xlane.f32.xlu0 %v361
        %v363 = vpop.xlane.xlu0 %362
        %v364 = vmul.f32 %v361, %v361
        %365 = vadd.xlane.f32.xlu0 %v364
        %v366 = vpop.xlane.xlu0 %365
        %v367 = vmul.f32 %v363, 0.03125
        %v368 = vmul.f32 %v366, 0.03125
        %v369 = vmul.f32 %v367, %v367
        %v370 = vsub.f32 %v368, %v369
        %v371 = vmax.f32 %v370, 0.0
        %v372 = vsub.f32 %v361, %v367
        %v373 = vadd.f32 %v371, 1e-12
        %v374 = vrsqrt.pop %v373
        %v375 = vmul.f32 %v374, %v373
        %v376 = vmul.f32 %v375, %v374
        %v377 = vmul.f32 0.5, %v376
        %v378 = vsub.f32 1.5, %v377
        %v379 = vmul.f32 %v374, %v378
        %vm380 = vweird.f32 %v373
        %vm381 = vweird.f32 %v374
        %vm382 = vmor %vm380, %vm381
        %v383 = vsel %vm382, %v374, %v379
        %v384 = vmul.f32 %v372, %v383
        %v385 = vld [vmem:[%s5] sm:$0x1]
        %v387 = vperm.slane %v385, 0
        %v389 = vmul.f32 %v384, %v387
        %v390 = vld [vmem:[%s6] sm:$0x1]
        %v392 = vperm.slane %v390, 0
        %v394 = vadd.f32 %v389, %v392
        %395 = vst [vmem:[%s299] sm:$0xff] %v394
        %s396 = sand.u32 %s187, 1
        %s397 = scalar_lea.sflag [#allocation5], %s396
        %s398 = sand.u32 %s187, 1
        %s399 = smul.addr %s398, 8
        %s400 = scalar_lea.vmem [#allocation6], %s399
        // Predicated region
        $region53: #{tpu_custom_call.1} parent=47 // pred_check
          %p401 = pneg %p197
        $region54: #{tpu_custom_call.1} parent=47 // pred_check_branch
          %403 = sbr.rel (%p401) target = $region56
        $region55: #{tpu_custom_call.1} parent=47 // pred_region
          %405 = vsyncadd %s397, 0
          %s406 = smul.addr %s22, 8
          %s407 = scalar_lea.hbm %s7, %s406
          %s409 = sshll.u32 %s400, 4
          %s410 = int_to_ptr.vmem [resolvable:$true] %s409
          %s411 = sshll.u32 %s407, 4
          %s412 = int_to_ptr.hbm [resolvable:$true] %s411
          %414 = dma.vmem_to_hbm [thread:$0]  %s410, 128, %s412, %s397
        $region56: #{tpu_custom_call.1} parent=47 // pred_fallthru
          _
      $region48: #{tpu_custom_call.1} parent=5 // pred_fallthru
        _
      %p415 = scmp.le.s32.totalorder 2, %s17
      // Predicated region
      $region57: #{tpu_custom_call.1} parent=5 // pred_check
        %p416 = pneg %p415
      $region58: #{tpu_custom_call.1} parent=5 // pred_check_branch
        %418 = sbr.rel (%p416) target = $region60
      $region59: #{tpu_custom_call.1} parent=5 // pred_region
        %s419 = ssub.s32 %s17, 2
        // Predicated region
        $region61: #{tpu_custom_call.1} parent=59 // pred_check
          %p420 = pneg %p203
        $region62: #{tpu_custom_call.1} parent=59 // pred_check_branch
          %422 = sbr.rel (%p420) target = $region64
        $region63: #{tpu_custom_call.1} parent=59 // pred_region
          %s423 = sand.u32 %s188, 1
          %s424 = scalar_lea.sflag [#allocation5], %s423
          %s425 = sand.u32 %s188, 1
          %s426 = smul.addr %s425, 8
          %s427 = scalar_lea.vmem [#allocation6], %s426
          %429 = dma.done %s424, 128
        $region64: #{tpu_custom_call.1} parent=59 // pred_fallthru
          _
      $region60: #{tpu_custom_call.1} parent=5 // pred_fallthru
        _
    $region6: #{tpu_custom_call.1} parent=1 // loop_footer
      %s21 = sadd.s32 1, %s17
    $region7: #{tpu_custom_call.1} parent=1 // loop_footer_branch
      %16 = sbr.rel target = $region3
    $region8: #{tpu_custom_call.1} parent=1 // loop_exit
      _
    %430 = vsyncpa [#allocation4], 1
    %s431 = scalar_lea.sflag [#allocation4], 1
    %432 = vsyncpa %s431, 1
    %433 = vsyncpa [#allocation5], 1
    %s434 = scalar_lea.sflag [#allocation5], 1
    %435 = vsyncpa %s434, 1

</llo_original>
